<compile_context>
chip_gen: v6e
topology: v6e:2x2x1
jax: 0.10.0
libtpu: 0.0.40
codegen_flags: <defaults>
</compile_context>

<pallas_src>
import jax
import jax.numpy as jnp
from jax.experimental import pallas as pl
from jax.experimental.pallas import tpu as pltpu


_FAST_PATH_MAX_IO_BYTES = 256 * 1024   # below this, plain fused XLA wins
_MAX_TILE_IO_BYTES = 8 << 20           # per-tile (c + out) cap; x2 when double-buffered


def _round_up(x, m):
    return ((x + m - 1) // m) * m


def _mu_sigma_kernel(c_ref, w_ref, b_ref, out_ref):
    # MXU matmul in f32, bias add, tanh (EUP).
    acc = jnp.dot(c_ref[...], w_ref[...], preferred_element_type=jnp.float32)
    acc = jnp.tanh(acc + b_ref[...])
    # exp only on the sigma half via a (1, 2z) lane mask; tanh output is
    # bounded in [-1, 1] so exp never overflows, and the mu half is untouched.
    two_z = out_ref.shape[-1]
    z_dim = two_z // 2
    col = jax.lax.broadcasted_iota(jnp.int32, (1, two_z), 1)
    out_ref[...] = jnp.where(col >= z_dim, jnp.exp(acc), acc).astype(out_ref.dtype)


def mu_sigma_pz_forward(c, w, b, *, block_b=8192, force_pallas=False):
    """c: [B, c_dim], w: [c_dim, 2*z_dim] (pre-transposed PyTorch weight),
    b: [2*z_dim] -> (mu, sigma), each [B, z_dim]."""
    B, c_dim = c.shape
    two_z = w.shape[1]
    assert two_z % 2 == 0, "Linear output dim must be 2*z_dim (even)"
    assert w.shape[0] == c_dim and b.shape == (two_z,)
    z_dim = two_z // 2
    itemsize = jnp.dtype(c.dtype).itemsize

    # ---- small-batch fast path -------------------------------------------
    io_bytes = B * (c_dim + two_z) * itemsize
    if not force_pallas and io_bytes < _FAST_PATH_MAX_IO_BYTES:
        out = jnp.tanh(c @ w + b[None, :])
        return out[:, :z_dim], jnp.exp(out[:, z_dim:])

    # ---- Pallas path -------------------------------------------------------
    b2d = b.reshape(1, two_z)

    # Bounded padding: only up to one sublane group (<= 6 extra rows) when the
    # batch is smaller than 8; never pad to a full tile and never copy a large c.
    if B < 8:
        c_in = jnp.pad(c, ((0, 8 - B), (0, 0)))
        Bp = 8
    else:
        c_in = c
        Bp = B

    # Batch tile: big enough to amortize the fixed per-step pipeline overhead,
    # at least 2 (even-count) grid steps so v7x's two TensorCores both work,
    # sublane-aligned, and capped so double-buffered tiles stay well inside
    # VMEM on every generation (incl. v7x's 64 MiB).
    row_bytes = (c_dim + two_z) * itemsize
    n_steps = max(2, pl.cdiv(Bp, block_b))
    if n_steps % 2:
        n_steps += 1
    tb = _round_up(pl.cdiv(Bp, n_steps), 8)
    max_tb = max(8, ((_MAX_TILE_IO_BYTES // row_bytes) // 8) * 8)
    tb = min(tb, max_tb)
    grid_steps = pl.cdiv(Bp, tb)

    # Explicit VMEM budget (portable across v5e/v6e/v7x scoped defaults).
    resident_bytes = (c_dim * two_z + two_z) * itemsize
    vmem_needed = 2 * tb * row_bytes + resident_bytes + (2 << 20)
    vmem_limit = int(min(max(vmem_needed, 32 << 20), 64 << 20))

    rows_computed = grid_steps * tb
    cost = pl.CostEstimate(
        flops=2 * rows_computed * c_dim * two_z,
        # tanh on all lanes + exp evaluated on all lanes inside the where.
        transcendentals=2 * rows_computed * two_z,
        bytes_accessed=(Bp * c_dim + c_dim * two_z + two_z + Bp * two_z) * itemsize,
    )

    out = pl.pallas_call(
        _mu_sigma_kernel,
        out_shape=jax.ShapeDtypeStruct((Bp, two_z), c.dtype),
        grid=(grid_steps,),
        in_specs=[
            # c: blocked over batch (double-buffered by the pipeline); the
            # ragged last block (if any) is masked by Pallas.
            pl.BlockSpec((tb, c_dim), lambda i: (i, 0)),
            # w, b: VMEM-resident across all grid steps.
            pl.BlockSpec((c_dim, two_z), lambda i: (0, 0)),
            pl.BlockSpec((1, two_z), lambda i: (0, 0)),
        ],
        out_specs=pl.BlockSpec((tb, two_z), lambda i: (i, 0)),
        compiler_params=pltpu.CompilerParams(
            dimension_semantics=("parallel",),
            vmem_limit_bytes=vmem_limit,
        ),
        cost_estimate=cost,
    )(c_in, w, b2d)

    # Split (and drop any <8-row padding) in the wrapper; XLA fuses the slices.
    mu = out[:B, :z_dim]
    sigma = out[:B, z_dim:]
    return mu, sigma


def mu_sigma_pz_reference(c, w, b):
    out = jnp.tanh(c @ w + b[None, :])
    z_dim = w.shape[1] // 2
    return out[:, :z_dim], jnp.exp(out[:, z_dim:])


if __name__ == "__main__":
    # Module-consistent small shapes: batch=2, c_dim=32, z_dim=16.
    B, C_DIM, Z_DIM = 2, 32, 16

    key = jax.random.PRNGKey(0)
    k_c, k_w, k_b = jax.random.split(key, 3)

    c = jax.random.normal(k_c, (B, C_DIM), dtype=jnp.float32)
    # Linear(c_dim, 2*z_dim) parameters, stored pre-transposed:
    # w is [c_dim, 2*z_dim] (PyTorch weight is [2*z_dim, c_dim]).
    w = jax.random.normal(k_w, (C_DIM, 2 * Z_DIM), dtype=jnp.float32) * 0.1
    b = jax.random.normal(k_b, (2 * Z_DIM,), dtype=jnp.float32) * 0.1

    mu_ref, sigma_ref = mu_sigma_pz_reference(c, w, b)

    # 1) Module-sized input through the Pallas kernel itself (forced past the
    #    small-batch fast path so the kernel is exercised at the real shape).
    mu, sigma = mu_sigma_pz_forward(c, w, b, force_pallas=True)
    jax.block_until_ready((mu, sigma))
    assert mu.shape == (B, Z_DIM) and sigma.shape == (B, Z_DIM)
    assert jnp.allclose(mu, mu_ref, atol=1e-5, rtol=1e-5)
    assert jnp.allclose(sigma, sigma_ref, atol=1e-5, rtol=1e-5)

    # 2) Same input through the auto path (small-B fast path, no pallas_call).
    mu_f, sigma_f = mu_sigma_pz_forward(c, w, b)
    jax.block_until_ready((mu_f, sigma_f))
    assert jnp.allclose(mu_f, mu_ref, atol=1e-5, rtol=1e-5)
    assert jnp.allclose(sigma_f, sigma_ref, atol=1e-5, rtol=1e-5)

    # 3) Large ragged batch: exercises the even multi-step grid (2 steps of
    #    2056 rows) and the ragged, non-tile-multiple last block with no
    #    padded copy of c.
    B2 = 4109
    c2 = jax.random.normal(jax.random.PRNGKey(1), (B2, C_DIM), dtype=jnp.float32)
    mu2, sigma2 = mu_sigma_pz_forward(c2, w, b)
    jax.block_until_ready((mu2, sigma2))
    mu2_ref, sigma2_ref = mu_sigma_pz_reference(c2, w, b)
    assert mu2.shape == (B2, Z_DIM) and sigma2.shape == (B2, Z_DIM)
    assert jnp.allclose(mu2, mu2_ref, atol=1e-5, rtol=1e-5)
    assert jnp.allclose(sigma2, sigma2_ref, atol=1e-5, rtol=1e-5)

    print("KERNEL_OK")
</pallas_src>

<mosaic_0001>
module attributes {stable_mosaic.version = 11 : i64} {
  func.func @_mu_sigma_kernel(%arg0: i32, %arg1: memref<8x32xf32, #tpu.memory_space<vmem>>, %arg2: memref<32x32xf32, #tpu.memory_space<vmem>>, %arg3: memref<1x32xf32, #tpu.memory_space<vmem>>, %arg4: memref<8x32xf32, #tpu.memory_space<vmem>>) attributes {dimension_semantics = [#tpu.dimension_semantics<parallel>], iteration_bounds = array<i64: 1>, scalar_prefetch = 0 : i64, scratch_operands = 0 : i64, tpu.core_type = #tpu.core_type<tc>, window_params = [{transform_indices = @transform_0, window_bounds = array<i64: 8, 32>}, {pipeline_mode = #tpu.pipeline_mode<synchronous>, transform_indices = @transform_1, window_bounds = array<i64: 32, 32>}, {pipeline_mode = #tpu.pipeline_mode<synchronous>, transform_indices = @transform_2, window_bounds = array<i64: 1, 32>}, {transform_indices = @transform_3, window_bounds = array<i64: 8, 32>}]} {
    %c0 = arith.constant 0 : index
    %c0_0 = arith.constant 0 : index
    %0 = vector.load %arg1[%c0, %c0_0] : memref<8x32xf32, #tpu.memory_space<vmem>>, vector<8x32xf32>
    %c0_1 = arith.constant 0 : index
    %c0_2 = arith.constant 0 : index
    %1 = vector.load %arg2[%c0_1, %c0_2] : memref<32x32xf32, #tpu.memory_space<vmem>>, vector<32x32xf32>
    %cst = arith.constant dense<0.000000e+00> : vector<8x32xf32>
    %2 = tpu.matmul %0, %1, %cst {dimension_numbers = #tpu.dot_dimension_numbers<[1], [0], [0], [1], [0, 0, 1, 1], [], []>} : vector<8x32xf32>, vector<32x32xf32>, vector<8x32xf32> -> vector<8x32xf32>
    %c0_3 = arith.constant 0 : index
    %c0_4 = arith.constant 0 : index
    %3 = vector.load %arg3[%c0_3, %c0_4] : memref<1x32xf32, #tpu.memory_space<vmem>>, vector<1x32xf32>
    %4 = vector.broadcast %3 : vector<1x32xf32> to vector<8x32xf32>
    %5 = arith.addf %2, %4 : vector<8x32xf32>
    %6 = math.tanh %5 : vector<8x32xf32>
    %7 = tpu.iota {dimensions = array<i32: 1>} : vector<1x32xi32>
    %c16_i32 = arith.constant 16 : i32
    %8 = vector.broadcast %c16_i32 : i32 to vector<1x32xi32>
    %9 = arith.cmpi sge, %7, %8 : vector<1x32xi32>
    %10 = math.exp %6 : vector<8x32xf32>
    %11 = vector.shape_cast %9 : vector<1x32xi1> to vector<1x32xi1>
    %12 = vector.broadcast %11 : vector<1x32xi1> to vector<8x32xi1>
    %13 = arith.select %12, %10, %6 : vector<8x32xi1>, vector<8x32xf32>
    %c0_5 = arith.constant 0 : index
    %c0_6 = arith.constant 0 : index
    %14 = vector.load %arg4[%c0_5, %c0_6] : memref<8x32xf32, #tpu.memory_space<vmem>>, vector<8x32xf32>
    tpu.vector_store %arg4[%c0_5, %c0_6], %13 {strides = array<i32>} : memref<8x32xf32, #tpu.memory_space<vmem>>, vector<8x32xf32>,
    return
  }
  func.func @transform_0(%arg0: i32) -> (i32, i32) {
    %c0_i32 = arith.constant 0 : i32
    %c0_i32_0 = arith.constant 0 : i32
    return %arg0, %c0_i32 : i32, i32
  }
  func.func @transform_1(%arg0: i32) -> (i32, i32) {
    %c0_i32 = arith.constant 0 : i32
    %c0_i32_0 = arith.constant 0 : i32
    %c0_i32_1 = arith.constant 0 : i32
    return %c0_i32, %c0_i32_0 : i32, i32
  }
  func.func @transform_2(%arg0: i32) -> (i32, i32) {
    %c0_i32 = arith.constant 0 : i32
    %c0_i32_0 = arith.constant 0 : i32
    %c0_i32_1 = arith.constant 0 : i32
    return %c0_i32, %c0_i32_0 : i32, i32
  }
  func.func @transform_3(%arg0: i32) -> (i32, i32) {
    %c0_i32 = arith.constant 0 : i32
    %c0_i32_0 = arith.constant 0 : i32
    return %arg0, %c0_i32 : i32, i32
  }
}

</mosaic_0001>

<llo_original>
// kernel: tpu_custom_call.1
$region0: #{tpu_custom_call.1}
  #allocation0 [shape = 'u32[]', space=smem, size = 0x4, offset = 0x4, fixed_abs, tag = 'smem constant byte address 0x4 - core index']
  #allocation1 [shape = 'u32[144,128]{1,0:T(1,128)}', space=vmem, size = 0x12000, scoped, tag = 'internal scratch']
  %s0 = inlined_call_operand.hbm [shape: f32[8,32], index: 0, kind: input, shape index: {}]
  %s1 = inlined_call_operand.hbm [shape: f32[32,32], index: 1, kind: input, shape index: {}]
  %s2 = inlined_call_operand.vmem [shape: f32[1,32], index: 2, kind: input, shape index: {}]
  %s3 = inlined_call_operand.hbm [shape: f32[8,32], index: 3, kind: output, shape index: {}]
  %s4 = sld [smem:[#allocation0]]
  $region30: #{tpu_custom_call.1} parent=0
    _
  %s6 = ssub.s32 1, %s4
  %s7 = scalar_select 0, %s6, %s4
  $region1: #{tpu_custom_call.1} parent=0
    #allocation2 [shape = 'u8[4096]{0}', space=vmem, size = 0x1000, scoped, tag = 'input window, operand 0, single buffered']
    #allocation3 [shape = 's32[1]{0}', space=sflag, size = 0x4, scoped, tag = 'scoped memory for tpu_custom_call.1']
    #allocation4 [shape = 's32[1]{0}', space=sflag, size = 0x4, scoped, tag = 'scoped memory for tpu_custom_call.1']
    #allocation5 [shape = 'u8[16384]{0}', space=vmem, size = 0x4000, scoped, tag = 'input window, operand 1, single buffered']
    #allocation6 [shape = 's32[1]{0}', space=sflag, size = 0x4, scoped, tag = 'scoped memory for tpu_custom_call.1']
    #allocation7 [shape = 'u8[4096]{0}', space=vmem, size = 0x1000, scoped, tag = 'output window, operand 0, single buffered']
    %8 = vsyncpa [#allocation3], 0
    %9 = vsyncpa [#allocation6], 0
    %10 = vsyncpa [#allocation4], 0
    // Predicated region
    $region2: #{tpu_custom_call.1} parent=1 // pred_check
      _
    $region3: #{tpu_custom_call.1} parent=1 // pred_check_branch
      %12 = sbr.rel (0) target = $region5
    $region4: #{tpu_custom_call.1} parent=1 // pred_region
      %s14 = ssub.s32 128, 128
      %15 = vsyncadd [#allocation3], %s14
      %s17 = sshll.u32 [#allocation2], 4
      %s18 = int_to_ptr.vmem [resolvable:$true] %s17
      %20 = dma.hbm_to_vmem [thread:$0]  %s0, 128, %s18, [#allocation3]
    $region5: #{tpu_custom_call.1} parent=1 // pred_fallthru
      _
    // Predicated region
    $region6: #{tpu_custom_call.1} parent=1 // pred_check
      _
    $region7: #{tpu_custom_call.1} parent=1 // pred_check_branch
      %22 = sbr.rel (0) target = $region9
    $region8: #{tpu_custom_call.1} parent=1 // pred_region
      %s24 = ssub.s32 512, 512
      %25 = vsyncadd [#allocation6], %s24
      %s26 = sshll.u32 [#allocation5], 4
      %s27 = int_to_ptr.vmem [resolvable:$true] %s26
      %32 = dma.hbm_to_vmem [thread:$0]  %s1, 512, %s27, [#allocation6], 128, 128, 8
    $region9: #{tpu_custom_call.1} parent=1 // pred_fallthru
      _
    // Predicated region
    $region10: #{tpu_custom_call.1} parent=1 // pred_check
      _
    $region11: #{tpu_custom_call.1} parent=1 // pred_check_branch
      %34 = sbr.rel (0) target = $region13
    $region12: #{tpu_custom_call.1} parent=1 // pred_region
      _
    $region13: #{tpu_custom_call.1} parent=1 // pred_fallthru
      _
    // Predicated region
    $region14: #{tpu_custom_call.1} parent=1 // pred_check
      _
    $region15: #{tpu_custom_call.1} parent=1 // pred_check_branch
      %36 = sbr.rel (0) target = $region17
    $region16: #{tpu_custom_call.1} parent=1 // pred_region
      %37 = dma.done [#allocation3], 128
    $region17: #{tpu_custom_call.1} parent=1 // pred_fallthru
      _
    // Predicated region
    $region18: #{tpu_custom_call.1} parent=1 // pred_check
      _
    $region19: #{tpu_custom_call.1} parent=1 // pred_check_branch
      %39 = sbr.rel (0) target = $region21
    $region20: #{tpu_custom_call.1} parent=1 // pred_region
      %40 = dma.done [#allocation6], 512
    $region21: #{tpu_custom_call.1} parent=1 // pred_fallthru
      _
    %v41 = vld [vmem:[#allocation2] sm:$0xff]
    %v42 = vld [vmem:[#allocation5] sm:$0xff]
    %v43 = vld [vmem:[#allocation5 + $0x8] sm:$0xff]
    %v44 = vld [vmem:[#allocation5 + $0x10] sm:$0xff]
    %v45 = vld [vmem:[#allocation5 + $0x18] sm:$0xff]
    %v46 = vld [vmem:[%s2] sm:$0x1]
    %v48 = vlaneseq
    %v49 = vshrl.u32 %v48, 7
    %v50 = vsub.s32 0, %v49
    %v51 = vrot.slane %v46, %v50
    %vm53 = vcmask 261120
    %v55 = vsel %vm53, %v41, 0
    %57 = vmatprep.subr.mxu0 0.0
    %58 = vmatpush1.msra.mxu0 0.0
    %59 = vmatprep.subr.mxu0 0.0
    %60 = vmatpush1.msra.mxu0 0.0
    %61 = vmatprep.subr.mxu0 0.0
    %62 = vmatpush1.msra.mxu0 0.0
    %63 = vmatprep.subr.mxu0 0.0
    %64 = vmatpush1.msra.mxu0 0.0
    %65 = vmatprep.subr.mxu0 0.0
    %66 = vmatpush1.msra.mxu0 0.0
    %67 = vmatprep.subr.mxu0 0.0
    %68 = vmatpush1.msra.mxu0 0.0
    %69 = vmatprep.subr.mxu0 0.0
    %70 = vmatpush1.msra.mxu0 0.0
    %71 = vmatprep.subr.mxu0 0.0
    %72 = vmatpush1.msra.mxu0 0.0
    %73 = vmatprep.subr.mxu0 0.0
    %74 = vmatpush1.msra.mxu0 0.0
    %75 = vmatprep.subr.mxu0 0.0
    %76 = vmatpush1.msra.mxu0 0.0
    %77 = vmatprep.subr.mxu0 0.0
    %78 = vmatpush1.msra.mxu0 0.0
    %79 = vmatprep.subr.mxu0 0.0
    %80 = vmatpush1.msra.mxu0 0.0
    %81 = vmatprep.subr.mxu0 0.0
    %82 = vmatpush1.msra.mxu0 %v45
    %83 = vmatprep.subr.mxu0 0.0
    %84 = vmatpush1.msra.mxu0 %v44
    %85 = vmatprep.subr.mxu0 0.0
    %86 = vmatpush1.msra.mxu0 %v43
    %87 = vmatprep.subr.mxu0 0.0
    %88 = vmatpush1.msra.mxu0 %v42
    %89 = vmatprep.subr.mxu0 0.0
    %90 = vmatpush2.msra.mxu0 0.0
    %91 = vmatprep.subr.mxu0 0.0
    %92 = vmatpush2.msra.mxu0 0.0
    %93 = vmatprep.subr.mxu0 0.0
    %94 = vmatpush2.msra.mxu0 0.0
    %95 = vmatprep.subr.mxu0 0.0
    %96 = vmatpush2.msra.mxu0 0.0
    %97 = vmatprep.subr.mxu0 0.0
    %98 = vmatpush2.msra.mxu0 0.0
    %99 = vmatprep.subr.mxu0 0.0
    %100 = vmatpush2.msra.mxu0 0.0
    %101 = vmatprep.subr.mxu0 0.0
    %102 = vmatpush2.msra.mxu0 0.0
    %103 = vmatprep.subr.mxu0 0.0
    %104 = vmatpush2.msra.mxu0 0.0
    %105 = vmatprep.subr.mxu0 0.0
    %106 = vmatpush2.msra.mxu0 0.0
    %107 = vmatprep.subr.mxu0 0.0
    %108 = vmatpush2.msra.mxu0 0.0
    %109 = vmatprep.subr.mxu0 0.0
    %110 = vmatpush2.msra.mxu0 0.0
    %111 = vmatprep.subr.mxu0 0.0
    %112 = vmatpush2.msra.mxu0 0.0
    %113 = vmatprep.subr.mxu0 0.0
    %114 = vmatpush2.msra.mxu0 0.0
    %115 = vmatprep.subr.mxu0 0.0
    %116 = vmatpush2.msra.mxu0 0.0
    %117 = vmatprep.subr.mxu0 0.0
    %118 = vmatpush2.msra.mxu0 0.0
    %119 = vmatprep.subr.mxu0 0.0
    %120 = vmatpush2.msra.mxu0 0.0
    %121 = vmatprep.mubr.f32.mxu0 0.0
    %122 = vmatmul.mubr.f32.gmra.mxu0 %v55
    %v123 = vpop.f32.mrf.mxu0
    %v124 = vadd.f32 %v51, %v123
    %v125 = vpop.f32.mrf.mxu0
    %126 = vdwg.mxu0
    %v127 = vtanh.pop %v124
    %v128 = vlaneseq
    %v129 = vand.u32 %v128, 127
    %vm130 = vcmp.ge.s32.totalorder %v129, 16
    %v131 = vmul.f32 %v127, 1.442695
    %v132 = vpow.pop %v131
    %v133 = vsel %vm130, 1, 0
    %vm134 = vcmp.eq.s32.totalorder %v133, 1
    %v135 = vsel %vm134, %v132, %v127
    %136 = vst.msk [vmem:[#allocation7] sm:$0xff] %vm53, %v135
    // Predicated region
    $region22: #{tpu_custom_call.1} parent=1 // pred_check
      _
    $region23: #{tpu_custom_call.1} parent=1 // pred_check_branch
      %138 = sbr.rel (0) target = $region25
    $region24: #{tpu_custom_call.1} parent=1 // pred_region
      %s140 = ssub.s32 128, 128
      %141 = vsyncadd [#allocation4], %s140
      %s143 = sshll.u32 [#allocation7], 4
      %s144 = int_to_ptr.vmem [resolvable:$true] %s143
      %146 = dma.vmem_to_hbm [thread:$0]  %s144, 128, %s3, [#allocation4]
    $region25: #{tpu_custom_call.1} parent=1 // pred_fallthru
      _
    // Predicated region
    $region26: #{tpu_custom_call.1} parent=1 // pred_check
      _
    $region27: #{tpu_custom_call.1} parent=1 // pred_check_branch
      %148 = sbr.rel (0) target = $region29
    $region28: #{tpu_custom_call.1} parent=1 // pred_region
      %149 = dma.done [#allocation4], 128
    $region29: #{tpu_custom_call.1} parent=1 // pred_fallthru
      _
    %150 = vsyncpa [#allocation3], 1
    %151 = vsyncpa [#allocation6], 1
    %152 = vsyncpa [#allocation4], 1

</llo_original>
